<compile_context>
chip_gen: v7x
topology: tpu7x:2x2x1
jax: 0.10.0
libtpu: 0.0.40
codegen_flags: <defaults>
</compile_context>

<pallas_src>
import functools

import jax
import jax.numpy as jnp
import numpy as np
from jax.experimental import pallas as pl
from jax.experimental.pallas import tpu as pltpu

_HI = jax.lax.Precision.HIGHEST


def _round_up(x, m):
    return ((x + m - 1) // m) * m


def _vmem_capacity_bytes():
    """Per-core VMEM capacity (generation-aware); conservative fallback."""
    try:
        return int(pltpu.get_tpu_info().vmem_capacity_bytes)
    except Exception:
        return 128 * 1024 * 1024


def _pick_batch_tile(Bn, Lc, Lq, D, vmem_budget_bytes):
    """Largest per-step batch tile that (a) divides B, (b) fits the VMEM
    budget, and (c) keeps the parallel grid axis long enough to pipeline:
    >= 4 steps preferred (v7x: 2 TensorCores x 2 steps each for double-buffer
    overlap), falling back to >= 2, then any."""
    # VMEM footprints are padded to (8, 128) tiles regardless of logical shape.
    Lc8 = _round_up(Lc, 8)
    Lq128 = _round_up(Lq, 128)
    D128 = _round_up(D, 128)
    # Per-example f32-equivalent working set:
    #   double-buffered pipelined blocks (C, Q, masks, 4D output)
    io = 2 * (Lc8 * D128 + Lq128 * D128 + Lc8 * 128 + 8 * Lq128 + Lc8 * 4 * D128)
    #   ~6 live S-sized (Lc,Lq) temporaries (S, Sr, Sc, Er, Ec + bf16 copies)
    #   plus (Lc,D)/(Lq,D)-sized temporaries (Cw, Cb, A, Bm, tmp, C*A, C*Bm).
    temps = 6 * Lc8 * Lq128 + 7 * Lc8 * D128 + 3 * Lq128 * D128
    per_ex_bytes = 4 * (io + temps)
    cap = max(1, vmem_budget_bytes // per_ex_bytes)
    divisors = [d for d in range(1, Bn + 1) if Bn % d == 0]
    feasible = [d for d in divisors if d <= cap]
    if not feasible:
        return 1
    for min_steps in (4, 2, 1):
        pref = [d for d in feasible if Bn // d >= min_steps]
        if pref:
            return max(pref)
    return 1


def _coattention_kernel(c_ref, q_ref, cmask_ref, qmask_ref, w_ref, b_ref, out_ref):
    # c_ref:     (Bt, Lc, D)   context block (f32)
    # q_ref:     (Bt, Lq, D)   query block   (f32)
    # cmask_ref: (Bt, Lc, 1)   context mask (0/1 f32)
    # qmask_ref: (Bt, 1,  Lq)  query mask   (0/1 f32)
    # w_ref:     (3, D)        rows = [w_c, w_q, w_cq] of the (1, 3D) Linear weight
    # b_ref:     (1, 1)        Linear bias (SMEM scalar)
    # out_ref:   (Bt, Lc, 4D)
    D = c_ref.shape[2]

    C = c_ref[...]
    Q = q_ref[...]
    cmask = cmask_ref[...]            # (Bt, Lc, 1)
    qmask = qmask_ref[...]            # (Bt, 1,  Lq)
    w = w_ref[...]                    # (3, D)
    bias = b_ref[0, 0]                # scalar from SMEM

    w_c = w[0:1, :][None]             # (1, 1, D)
    w_q = w[1:2, :][None]
    w_cq = w[2:3, :][None]

    # Decomposed + folded trilinear similarity:
    #   S[b,i,j] = (C[b,i]*w_cq + w_q) . Q[b,j]  +  (C[b,i].w_c + bias)
    # bf16 MXU operands, f32 accumulation.
    Cw = (C * w_cq + w_q).astype(jnp.bfloat16)
    Qb = Q.astype(jnp.bfloat16)
    s_c = jnp.sum(C * w_c, axis=2, keepdims=True) + bias                # (Bt, Lc, 1)
    S = jnp.einsum("bid,bjd->bij", Cw, Qb,
                   preferred_element_type=jnp.float32) + s_c            # (Bt, Lc, Lq)

    # Masked, per-axis-stabilized softmax numerators.  The additive log-mask
    # makes the maxima *masked* maxima (matching masked_fill(-inf)+softmax)
    # and zeroes masked positions inside the exp — no separate mask multiply.
    # NOTE: a fully-masked row/col yields a uniform distribution here (the
    # PyTorch reference yields NaN); only differs in that degenerate case.
    logq = jnp.where(qmask > 0, 0.0, -1e30)                             # (Bt, 1,  Lq)
    logc = jnp.where(cmask > 0, 0.0, -1e30)                             # (Bt, Lc, 1)
    Sr = S + logq
    Sc = S + logc
    m_row = jnp.max(Sr, axis=2, keepdims=True)                          # (Bt, Lc, 1)
    m_col = jnp.max(Sc, axis=1, keepdims=True)                          # (Bt, 1,  Lq)
    Er = jnp.exp(Sr - m_row)                                            # row numerator
    Ec = jnp.exp(Sc - m_col)                                            # col numerator
    inv_row = pl.reciprocal(jnp.sum(Er, axis=2, keepdims=True), approx=True)  # (Bt,Lc,1)
    inv_col = pl.reciprocal(jnp.sum(Ec, axis=1, keepdims=True), approx=True)  # (Bt,1,Lq)

    Er_b = Er.astype(jnp.bfloat16)                 # un-normalized row weights
    Scol_b = (Ec * inv_col).astype(jnp.bfloat16)   # normalized col softmax
    Cb = C.astype(jnp.bfloat16)

    # A = S_row @ Q and B = S_row @ (S_col^T @ C), with the row normalization
    # deferred to the (Lc, D)-sized results (1/rowsum is constant along the
    # contracted j axis, so the results are identical).
    A = jnp.einsum("bij,bjd->bid", Er_b, Qb,
                   preferred_element_type=jnp.float32) * inv_row        # (Bt, Lc, D)
    # TODO(synk): per perf review, inspect the Mosaic MLIR for this contraction
    # over the sublane axis of both operands (possible hidden XLU transpose).
    tmp = jnp.einsum("bij,bid->bjd", Scol_b, Cb,
                     preferred_element_type=jnp.float32)                # (Bt, Lq, D)
    Bm = jnp.einsum("bij,bjd->bid", Er_b, tmp.astype(jnp.bfloat16),
                    preferred_element_type=jnp.float32) * inv_row       # (Bt, Lc, D)

    odt = out_ref.dtype
    if D % 128 == 0:
        # Lane-dense slice stores, no concat temporary.
        out_ref[:, :, 0:D] = C.astype(odt)
        out_ref[:, :, D:2 * D] = A.astype(odt)
        out_ref[:, :, 2 * D:3 * D] = (C * A).astype(odt)
        out_ref[:, :, 3 * D:4 * D] = (C * Bm).astype(odt)
    else:
        # For small D a single 4D-wide store is lane-denser than 4 narrow ones.
        out_ref[...] = jnp.concatenate([C, A, C * A, C * Bm], axis=-1).astype(odt)


@functools.partial(jax.jit, static_argnames=("out_dtype",))
def coattention(C, Q, C_mask, Q_mask, weight, bias, out_dtype=None):
    """C: (B, Lc, D), Q: (B, Lq, D), masks: (B, Lc)/(B, Lq), weight: (1, 3D), bias: (1,).

    out_dtype: optional output dtype (e.g. jnp.bfloat16 to halve HBM writeback);
    defaults to C.dtype."""
    Bn, Lc, D = C.shape
    Lq = Q.shape[1]
    f32 = jnp.float32
    odt = jnp.dtype(out_dtype) if out_dtype is not None else C.dtype

    # No sequence padding / no output slicing: the block last-two-dims equal
    # the full array dims, and Mosaic masks the internal (8,128) padding.
    Cf = C.astype(f32)
    Qf = Q.astype(f32)
    cmask = C_mask.astype(f32).reshape(Bn, Lc, 1)
    qmask = Q_mask.astype(f32).reshape(Bn, 1, Lq)
    w3 = weight.reshape(3, D).astype(f32)          # rows = [w_c, w_q, w_cq]
    b2 = bias.reshape(1, 1).astype(f32)

    cap_bytes = _vmem_capacity_bytes()             # 128 MiB v5e/v6e, 64 MiB/TC v7x
    Bt = _pick_batch_tile(Bn, Lc, Lq, D, vmem_budget_bytes=int(0.55 * cap_bytes))
    grid = (Bn // Bt,)
    vmem_limit = max(32 * 1024 * 1024,
                     min(int(0.70 * cap_bytes), cap_bytes - (8 << 20)))

    grid_spec = pltpu.PrefetchScalarGridSpec(
        num_scalar_prefetch=0,
        grid=grid,
        in_specs=[
            pl.BlockSpec((Bt, Lc, D), lambda b: (b, 0, 0)),
            pl.BlockSpec((Bt, Lq, D), lambda b: (b, 0, 0)),
            pl.BlockSpec((Bt, Lc, 1), lambda b: (b, 0, 0)),
            pl.BlockSpec((Bt, 1, Lq), lambda b: (b, 0, 0)),
            pl.BlockSpec((3, D), lambda b: (0, 0)),
            pl.BlockSpec((1, 1), lambda b: (0, 0),
                         memory_space=pltpu.MemorySpace.SMEM),
        ],
        out_specs=pl.BlockSpec((Bt, Lc, 4 * D), lambda b: (b, 0, 0)),
    )

    out = pl.pallas_call(
        _coattention_kernel,
        out_shape=jax.ShapeDtypeStruct((Bn, Lc, 4 * D), odt),
        grid_spec=grid_spec,
        compiler_params=pltpu.CompilerParams(
            dimension_semantics=("parallel",),
            vmem_limit_bytes=vmem_limit,
        ),
    )(Cf, Qf, cmask, qmask, w3, b2)

    return out


def coattention_ref(C, Q, C_mask, Q_mask, weight, bias):
    """Pure-JAX reference mirroring the PyTorch forward exactly (f32, HIGHEST)."""
    Bn, Lc, D = C.shape
    Lq = Q.shape[1]
    Ce = jnp.broadcast_to(C[:, :, None, :], (Bn, Lc, Lq, D))
    Qe = jnp.broadcast_to(Q[:, None, :, :], (Bn, Lc, Lq, D))
    x = jnp.concatenate([Ce, Qe, Ce * Qe], axis=-1)                      # (B, Lc, Lq, 3D)
    S = jnp.einsum("bijk,k->bij", x, weight[0], precision=_HI) + bias[0]
    S_row = jnp.where(Q_mask[:, None, :] == 0, -jnp.inf, S)
    S_row = jax.nn.softmax(S_row, axis=2)
    S_col = jnp.where(C_mask[:, :, None] == 0, -jnp.inf, S)
    S_col = jax.nn.softmax(S_col, axis=1)
    A = jnp.einsum("bij,bjd->bid", S_row, Q, precision=_HI)
    Bm = jnp.einsum("bij,bjd->bid", S_row,
                    jnp.einsum("bji,bjd->bid", S_col, C, precision=_HI), precision=_HI)
    return jnp.concatenate([C, A, C * A, C * Bm], axis=-1)


if __name__ == "__main__":
    key = jax.random.PRNGKey(0)
    k1, k2, k3, k4 = jax.random.split(key, 4)

    B, Lc, Lq, D = 2, 16, 8, 32                                # small test shapes
    C = jax.random.normal(k1, (B, Lc, D), dtype=jnp.float32)
    Q = jax.random.normal(k2, (B, Lq, D), dtype=jnp.float32)

    # Padding masks (1 = valid, 0 = pad), deterministic lengths.
    c_lens = jnp.array([16, 12], dtype=jnp.int32)
    q_lens = jnp.array([8, 5], dtype=jnp.int32)
    C_mask = (jnp.arange(Lc)[None, :] < c_lens[:, None]).astype(jnp.float32)
    Q_mask = (jnp.arange(Lq)[None, :] < q_lens[:, None]).astype(jnp.float32)

    # nn.Linear(3D, 1) parameters, deterministic init.
    weight = 0.1 * jax.random.normal(k3, (1, 3 * D), dtype=jnp.float32)
    bias = 0.1 * jax.random.normal(k4, (1,), dtype=jnp.float32)

    out = coattention(C, Q, C_mask, Q_mask, weight, bias)
    out = jax.block_until_ready(out)

    ref = coattention_ref(C, Q, C_mask, Q_mask, weight, bias)
    # bf16 MXU operands + approx reciprocal vs. an f32-HIGHEST reference:
    # relaxed tolerance (documented accuracy contract).
    np.testing.assert_allclose(np.asarray(out), np.asarray(ref), rtol=3e-2, atol=3e-2)

    print("KERNEL_OK")
</pallas_src>

<mosaic_0001>
module attributes {stable_mosaic.version = 11 : i64} {
  func.func @_coattention_kernel(%arg0: i32, %arg1: memref<1x16x32xf32, #tpu.memory_space<vmem>>, %arg2: memref<1x8x32xf32, #tpu.memory_space<vmem>>, %arg3: memref<1x16x1xf32, #tpu.memory_space<vmem>>, %arg4: memref<1x1x8xf32, #tpu.memory_space<vmem>>, %arg5: memref<3x32xf32, #tpu.memory_space<vmem>>, %arg6: memref<1x1xf32, #tpu.memory_space<smem>>, %arg7: memref<1x16x128xf32, #tpu.memory_space<vmem>>) attributes {dimension_semantics = [#tpu.dimension_semantics<parallel>], iteration_bounds = array<i64: 2>, scalar_prefetch = 0 : i64, scratch_operands = 0 : i64, tpu.core_type = #tpu.core_type<tc>, window_params = [{transform_indices = @transform_0, window_bounds = array<i64: 1, 16, 32>}, {transform_indices = @transform_1, window_bounds = array<i64: 1, 8, 32>}, {transform_indices = @transform_2, window_bounds = array<i64: 1, 16, 1>}, {transform_indices = @transform_3, window_bounds = array<i64: 1, 1, 8>}, {pipeline_mode = #tpu.pipeline_mode<synchronous>, transform_indices = @transform_4, window_bounds = array<i64: 3, 32>}, {transform_indices = @transform_5, window_bounds = array<i64: 1, 1>}, {transform_indices = @transform_6, window_bounds = array<i64: 1, 16, 128>}]} {
    %c0 = arith.constant 0 : index
    %c0_0 = arith.constant 0 : index
    %c0_1 = arith.constant 0 : index
    %0 = vector.load %arg1[%c0, %c0_0, %c0_1] : memref<1x16x32xf32, #tpu.memory_space<vmem>>, vector<1x16x32xf32>
    %c0_2 = arith.constant 0 : index
    %c0_3 = arith.constant 0 : index
    %c0_4 = arith.constant 0 : index
    %1 = vector.load %arg2[%c0_2, %c0_3, %c0_4] : memref<1x8x32xf32, #tpu.memory_space<vmem>>, vector<1x8x32xf32>
    %c0_5 = arith.constant 0 : index
    %c0_6 = arith.constant 0 : index
    %c0_7 = arith.constant 0 : index
    %2 = vector.load %arg3[%c0_5, %c0_6, %c0_7] : memref<1x16x1xf32, #tpu.memory_space<vmem>>, vector<1x16x1xf32>
    %c0_8 = arith.constant 0 : index
    %c0_9 = arith.constant 0 : index
    %c0_10 = arith.constant 0 : index
    %3 = vector.load %arg4[%c0_8, %c0_9, %c0_10] : memref<1x1x8xf32, #tpu.memory_space<vmem>>, vector<1x1x8xf32>
    %c0_11 = arith.constant 0 : index
    %c0_12 = arith.constant 0 : index
    %4 = vector.load %arg5[%c0_11, %c0_12] : memref<3x32xf32, #tpu.memory_space<vmem>>, vector<3x32xf32>
    %c0_13 = arith.constant 0 : index
    %c0_14 = arith.constant 0 : index
    %5 = memref.load %arg6[%c0_13, %c0_14] : memref<1x1xf32, #tpu.memory_space<smem>>
    %6 = vector.extract_strided_slice %4 {offsets = [0, 0], sizes = [1, 32], strides = [1, 1]} : vector<3x32xf32> to vector<1x32xf32>
    %7 = vector.shape_cast %6 : vector<1x32xf32> to vector<1x1x32xf32>
    %8 = vector.extract_strided_slice %4 {offsets = [1, 0], sizes = [1, 32], strides = [1, 1]} : vector<3x32xf32> to vector<1x32xf32>
    %9 = vector.shape_cast %8 : vector<1x32xf32> to vector<1x1x32xf32>
    %10 = vector.extract_strided_slice %4 {offsets = [2, 0], sizes = [1, 32], strides = [1, 1]} : vector<3x32xf32> to vector<1x32xf32>
    %11 = vector.shape_cast %10 : vector<1x32xf32> to vector<1x1x32xf32>
    %12 = vector.broadcast %11 : vector<1x1x32xf32> to vector<1x16x32xf32>
    %13 = arith.mulf %0, %12 : vector<1x16x32xf32>
    %14 = vector.broadcast %9 : vector<1x1x32xf32> to vector<1x16x32xf32>
    %15 = arith.addf %13, %14 : vector<1x16x32xf32>
    %16 = arith.truncf %15 : vector<1x16x32xf32> to vector<1x16x32xbf16>
    %17 = arith.truncf %1 : vector<1x8x32xf32> to vector<1x8x32xbf16>
    %18 = vector.broadcast %7 : vector<1x1x32xf32> to vector<1x16x32xf32>
    %19 = arith.mulf %0, %18 : vector<1x16x32xf32>
    %cst = arith.constant dense<0.000000e+00> : vector<1x16xf32>
    %20 = vector.multi_reduction <add>, %19, %cst [2] : vector<1x16x32xf32> to vector<1x16xf32>
    %21 = vector.shape_cast %20 : vector<1x16xf32> to vector<1x16x1xf32>
    %22 = vector.broadcast %5 : f32 to vector<1x16x1xf32>
    %23 = arith.addf %21, %22 : vector<1x16x1xf32>
    "tpu.trace_start"() <{level = 10 : i32, message = "bid,bjd->bij"}> : () -> ()
    %cst_15 = arith.constant dense<0.000000e+00> : vector<1x16x8xf32>
    %24 = tpu.matmul %16, %17, %cst_15 {dimension_numbers = #tpu.dot_dimension_numbers<[2], [2], [1], [1], [0, 0, 0, 1, 1, 1], [0], [0]>} : vector<1x16x32xbf16>, vector<1x8x32xbf16>, vector<1x16x8xf32> -> vector<1x16x8xf32>
    "tpu.trace_stop"() : () -> ()
    %25 = vector.broadcast %23 : vector<1x16x1xf32> to vector<1x16x8xf32>
    %26 = arith.addf %24, %25 : vector<1x16x8xf32>
    %cst_16 = arith.constant 0.000000e+00 : f32
    %27 = vector.broadcast %cst_16 : f32 to vector<1x1x8xf32>
    %28 = arith.cmpf ogt, %3, %27 : vector<1x1x8xf32>
    %cst_17 = arith.constant 0.000000e+00 : f32
    %cst_18 = arith.constant -1.000000e+30 : f32
    %29 = vector.broadcast %cst_17 : f32 to vector<1x1x8xf32>
    %30 = vector.broadcast %cst_18 : f32 to vector<1x1x8xf32>
    %31 = arith.select %28, %29, %30 : vector<1x1x8xi1>, vector<1x1x8xf32>
    %cst_19 = arith.constant 0.000000e+00 : f32
    %32 = vector.broadcast %cst_19 : f32 to vector<1x16x1xf32>
    %33 = arith.cmpf ogt, %2, %32 : vector<1x16x1xf32>
    %cst_20 = arith.constant 0.000000e+00 : f32
    %cst_21 = arith.constant -1.000000e+30 : f32
    %34 = vector.broadcast %cst_20 : f32 to vector<1x16x1xf32>
    %35 = vector.broadcast %cst_21 : f32 to vector<1x16x1xf32>
    %36 = arith.select %33, %34, %35 : vector<1x16x1xi1>, vector<1x16x1xf32>
    %37 = vector.broadcast %31 : vector<1x1x8xf32> to vector<1x16x8xf32>
    %38 = arith.addf %26, %37 : vector<1x16x8xf32>
    %39 = vector.broadcast %36 : vector<1x16x1xf32> to vector<1x16x8xf32>
    %40 = arith.addf %26, %39 : vector<1x16x8xf32>
    %cst_22 = arith.constant dense<0xFF800000> : vector<1x16xf32>
    %41 = vector.multi_reduction <maximumf>, %38, %cst_22 [2] : vector<1x16x8xf32> to vector<1x16xf32>
    %42 = vector.shape_cast %41 : vector<1x16xf32> to vector<1x16x1xf32>
    %cst_23 = arith.constant dense<0xFF800000> : vector<1x8xf32>
    %43 = vector.multi_reduction <maximumf>, %40, %cst_23 [1] : vector<1x16x8xf32> to vector<1x8xf32>
    %44 = vector.shape_cast %43 : vector<1x8xf32> to vector<1x1x8xf32>
    %45 = vector.broadcast %42 : vector<1x16x1xf32> to vector<1x16x8xf32>
    %46 = arith.subf %38, %45 : vector<1x16x8xf32>
    %47 = math.exp %46 : vector<1x16x8xf32>
    %48 = vector.broadcast %44 : vector<1x1x8xf32> to vector<1x16x8xf32>
    %49 = arith.subf %40, %48 : vector<1x16x8xf32>
    %50 = math.exp %49 : vector<1x16x8xf32>
    %cst_24 = arith.constant dense<0.000000e+00> : vector<1x16xf32>
    %51 = vector.multi_reduction <add>, %47, %cst_24 [2] : vector<1x16x8xf32> to vector<1x16xf32>
    %52 = vector.shape_cast %51 : vector<1x16xf32> to vector<1x16x1xf32>
    %53 = tpu.reciprocal %52 {approx = true} : vector<1x16x1xf32> -> vector<1x16x1xf32>
    %cst_25 = arith.constant dense<0.000000e+00> : vector<1x8xf32>
    %54 = vector.multi_reduction <add>, %50, %cst_25 [1] : vector<1x16x8xf32> to vector<1x8xf32>
    %55 = vector.shape_cast %54 : vector<1x8xf32> to vector<1x1x8xf32>
    %56 = tpu.reciprocal %55 {approx = true} : vector<1x1x8xf32> -> vector<1x1x8xf32>
    %57 = arith.truncf %47 : vector<1x16x8xf32> to vector<1x16x8xbf16>
    %58 = vector.broadcast %56 : vector<1x1x8xf32> to vector<1x16x8xf32>
    %59 = arith.mulf %50, %58 : vector<1x16x8xf32>
    %60 = arith.truncf %59 : vector<1x16x8xf32> to vector<1x16x8xbf16>
    %61 = arith.truncf %0 : vector<1x16x32xf32> to vector<1x16x32xbf16>
    "tpu.trace_start"() <{level = 10 : i32, message = "bij,bjd->bid"}> : () -> ()
    %cst_26 = arith.constant dense<0.000000e+00> : vector<1x16x32xf32>
    %62 = tpu.matmul %57, %17, %cst_26 {dimension_numbers = #tpu.dot_dimension_numbers<[2], [1], [1], [2], [0, 0, 0, 1, 1, 2], [0], [0]>} : vector<1x16x8xbf16>, vector<1x8x32xbf16>, vector<1x16x32xf32> -> vector<1x16x32xf32>
    "tpu.trace_stop"() : () -> ()
    %63 = vector.broadcast %53 : vector<1x16x1xf32> to vector<1x16x32xf32>
    %64 = arith.mulf %62, %63 : vector<1x16x32xf32>
    "tpu.trace_start"() <{level = 10 : i32, message = "bij,bid->bjd"}> : () -> ()
    %cst_27 = arith.constant dense<0.000000e+00> : vector<1x8x32xf32>
    %65 = tpu.matmul %60, %61, %cst_27 {dimension_numbers = #tpu.dot_dimension_numbers<[1], [1], [2], [2], [0, 0, 0, 2, 1, 2], [0], [0]>} : vector<1x16x8xbf16>, vector<1x16x32xbf16>, vector<1x8x32xf32> -> vector<1x8x32xf32>
    "tpu.trace_stop"() : () -> ()
    %66 = arith.truncf %65 : vector<1x8x32xf32> to vector<1x8x32xbf16>
    "tpu.trace_start"() <{level = 10 : i32, message = "bij,bjd->bid"}> : () -> ()
    %cst_28 = arith.constant dense<0.000000e+00> : vector<1x16x32xf32>
    %67 = tpu.matmul %57, %66, %cst_28 {dimension_numbers = #tpu.dot_dimension_numbers<[2], [1], [1], [2], [0, 0, 0, 1, 1, 2], [0], [0]>} : vector<1x16x8xbf16>, vector<1x8x32xbf16>, vector<1x16x32xf32> -> vector<1x16x32xf32>
    "tpu.trace_stop"() : () -> ()
    %68 = vector.broadcast %53 : vector<1x16x1xf32> to vector<1x16x32xf32>
    %69 = arith.mulf %67, %68 : vector<1x16x32xf32>
    %70 = arith.mulf %0, %64 : vector<1x16x32xf32>
    %71 = arith.mulf %0, %69 : vector<1x16x32xf32>
    %72 = tpu.concatenate %0, %64, %70, %71 in 2 : vector<1x16x32xf32>, vector<1x16x32xf32>, vector<1x16x32xf32>, vector<1x16x32xf32> -> vector<1x16x128xf32>
    %c0_29 = arith.constant 0 : index
    %c0_30 = arith.constant 0 : index
    %c0_31 = arith.constant 0 : index
    %73 = vector.load %arg7[%c0_29, %c0_30, %c0_31] : memref<1x16x128xf32, #tpu.memory_space<vmem>>, vector<1x16x128xf32>
    tpu.vector_store %arg7[%c0_29, %c0_30, %c0_31], %72 {strides = array<i32>} : memref<1x16x128xf32, #tpu.memory_space<vmem>>, vector<1x16x128xf32>,
    return
  }
  func.func @transform_0(%arg0: i32) -> (i32, i32, i32) {
    %c0_i32 = arith.constant 0 : i32
    %c0_i32_0 = arith.constant 0 : i32
    %c0_i32_1 = arith.constant 0 : i32
    return %arg0, %c0_i32, %c0_i32_0 : i32, i32, i32
  }
  func.func @transform_1(%arg0: i32) -> (i32, i32, i32) {
    %c0_i32 = arith.constant 0 : i32
    %c0_i32_0 = arith.constant 0 : i32
    %c0_i32_1 = arith.constant 0 : i32
    return %arg0, %c0_i32, %c0_i32_0 : i32, i32, i32
  }
  func.func @transform_2(%arg0: i32) -> (i32, i32, i32) {
    %c0_i32 = arith.constant 0 : i32
    %c0_i32_0 = arith.constant 0 : i32
    %c0_i32_1 = arith.constant 0 : i32
    return %arg0, %c0_i32, %c0_i32_0 : i32, i32, i32
  }
  func.func @transform_3(%arg0: i32) -> (i32, i32, i32) {
    %c0_i32 = arith.constant 0 : i32
    %c0_i32_0 = arith.constant 0 : i32
    %c0_i32_1 = arith.constant 0 : i32
    return %arg0, %c0_i32, %c0_i32_0 : i32, i32, i32
  }
  func.func @transform_4(%arg0: i32) -> (i32, i32) {
    %c0_i32 = arith.constant 0 : i32
    %c0_i32_0 = arith.constant 0 : i32
    %c0_i32_1 = arith.constant 0 : i32
    return %c0_i32, %c0_i32_0 : i32, i32
  }
  func.func @transform_5(%arg0: i32) -> (i32, i32) {
    %c0_i32 = arith.constant 0 : i32
    %c0_i32_0 = arith.constant 0 : i32
    %c0_i32_1 = arith.constant 0 : i32
    return %c0_i32, %c0_i32_0 : i32, i32
  }
  func.func @transform_6(%arg0: i32) -> (i32, i32, i32) {
    %c0_i32 = arith.constant 0 : i32
    %c0_i32_0 = arith.constant 0 : i32
    %c0_i32_1 = arith.constant 0 : i32
    return %arg0, %c0_i32, %c0_i32_0 : i32, i32, i32
  }
}

</mosaic_0001>

<llo_original>
// kernel: coattention.1
$region0: #{coattention.1}
  #allocation0 [shape = 'u32[]', space=smem, size = 0x4, offset = 0x4, fixed_abs, tag = 'smem constant byte address 0x4 - core index']
  #allocation1 [shape = 'u32[144,128]{1,0:T(1,128)}', space=vmem, size = 0x12000, scoped, tag = 'internal scratch']
  #allocation2 [shape = 'f32[1,1]{1,0:T(1,128)S(6)}', space=smem, size = 0x200, scoped, tag = 'scoped memory for coattention.1']
  %s0 = inlined_call_operand.hbm [shape: f32[2,16,32], index: 0, kind: input, shape index: {}]
  %s1 = inlined_call_operand.hbm [shape: f32[2,8,32], index: 1, kind: input, shape index: {}]
  %s2 = inlined_call_operand.hbm [shape: f32[2,16,1], index: 2, kind: input, shape index: {}]
  %s3 = inlined_call_operand.hbm [shape: f32[2,1,8], index: 3, kind: input, shape index: {}]
  %s4 = inlined_call_operand.hbm [shape: f32[3,32], index: 4, kind: input, shape index: {}]
  %s5 = inlined_call_operand.<no memory space> [shape: f32[1,1], index: 5, kind: input, shape index: {}]
  %s6 = inlined_call_operand.hbm [shape: f32[2,16,128], index: 6, kind: output, shape index: {}]
  %s7 = sld [smem:[#allocation0]]
  $region77: #{coattention.1} parent=0
    _
  %s9 = ssub.s32 1, %s7
  %s10 = scalar_select 0, %s9, %s7
  %11 = sst [smem:[#allocation2]] %s5
  $region1: #{coattention.1} parent=0
    #allocation3 [shape = 'u8[16384]{0}', space=vmem, size = 0x4000, scoped, tag = 'input window, operand 0']
    #allocation4 [shape = 's32[2]{0}', space=sflag, size = 0x8, scoped, tag = 'scoped memory for coattention.1']
    #allocation5 [shape = 's32[2]{0}', space=sflag, size = 0x8, scoped, tag = 'scoped memory for coattention.1']
    #allocation6 [shape = 'u8[8192]{0}', space=vmem, size = 0x2000, scoped, tag = 'input window, operand 1']
    #allocation7 [shape = 's32[2]{0}', space=sflag, size = 0x8, scoped, tag = 'scoped memory for coattention.1']
    #allocation8 [shape = 'u8[16384]{0}', space=vmem, size = 0x4000, scoped, tag = 'input window, operand 2']
    #allocation9 [shape = 'u8[1024]{0}', space=vmem, size = 0x400, scoped, tag = 'input window, operand 3']
    #allocation10 [shape = 's32[2]{0}', space=sflag, size = 0x8, scoped, tag = 'scoped memory for coattention.1']
    #allocation11 [shape = 'u8[2048]{0}', space=vmem, size = 0x800, scoped, tag = 'input window, operand 4, single buffered']
    #allocation12 [shape = 'u8[16384]{0}', space=vmem, size = 0x4000, scoped, tag = 'output window, operand 0']
    %12 = vsyncpa [#allocation4], 0
    %s13 = scalar_lea.sflag [#allocation4], 1
    %14 = vsyncpa %s13, 0
    %15 = vsyncpa [#allocation7], 0
    %s16 = scalar_lea.sflag [#allocation7], 1
    %17 = vsyncpa %s16, 0
    %18 = vsyncpa [#allocation10], 0
    %s19 = scalar_lea.sflag [#allocation10], 1
    %20 = vsyncpa %s19, 0
    %21 = vsyncpa [#allocation5], 0
    %s22 = scalar_lea.sflag [#allocation5], 1
    %23 = vsyncpa %s22, 0
    loop: start=0, step=1, limit=4
    $region2: #{coattention.1} parent=1 // loop_pre_header
      _
    $region3: #{coattention.1} parent=1 // loop_header
      %s25 = sphi 0, %s29
      %p26 = scmp.ge.s32.totalorder %s25, 4
      %s35 = sphi 0, %s37
      %s38 = sphi 0, %s35
      %s39 = sphi 0, %s38
      %s55 = sphi 0, %s39
      %s61 = sphi 0, %s63
      %s64 = sphi 0, %s61
      %s65 = sphi 0, %s64
      %s81 = sphi 0, %s65
      %s87 = sphi 0, %s89
      %s90 = sphi 0, %s87
      %s91 = sphi 0, %s90
      %s107 = sphi 0, %s91
      %s113 = sphi 0, %s115
      %s116 = sphi 0, %s113
      %s117 = sphi 0, %s116
      %s133 = sphi 0, %s117
      %s137 = sphi 0, %s137
      %s139 = sphi 0, %s137
      %s140 = sphi 0, %s139
      %s154 = sphi 0, %s140
      %s158 = sphi 0, %s158
      %s160 = sphi 0, %s158
      %s161 = sphi 0, %s160
      %s175 = sphi 0, %s161
      %s181 = sphi 0, %s183
      %s184 = sphi 0, %s181
      %s185 = sphi 0, %s184
      %s201 = sphi 0, %s185
    $region4: #{coattention.1} parent=1 // loop_header_branch
      %28 = sbr.rel (%p26) target = $region8
    $region5: #{coattention.1} parent=1 // loop_body
      %s30 = ssub.s32 %s25, 1
      %s31 = ssub.s32 %s25, 2
      %s32 = sadd.s32 %s25, 1
      %s33 = ssub.s32 %s25, %s32
      %p34 = scmp.eq.s32.totalorder %s33, 0
      %s36 = sadd.s32 %s35, 1
      %s37 = scalar_select %p34, %s35, %s36
      %p40 = pneg %p34
      %p41 = scmp.eq.s32.totalorder %s25, 1
      %p42 = por %p40, %p41
      %p43 = scmp.ne.s32.totalorder %s35, %s38
      %p44 = scmp.eq.s32.totalorder %s25, 0
      %p45 = por %p43, %p44
      %p46 = scmp.ne.s32.totalorder %s35, %s38
      %p47 = scmp.eq.s32.totalorder %s30, 1
      %p48 = por %p46, %p47
      %p49 = scmp.ne.s32.totalorder %s38, %s39
      %p50 = scmp.eq.s32.totalorder %s30, 0
      %p51 = por %p49, %p50
      %p52 = scmp.ne.s32.totalorder %s38, %s39
      %p53 = scmp.eq.s32.totalorder %s31, 1
      %p54 = por %p52, %p53
      %p56 = scmp.ne.s32.totalorder %s39, %s55
      %p57 = scmp.eq.s32.totalorder %s31, 0
      %p58 = por %p56, %p57
      %s59 = ssub.s32 %s25, %s32
      %p60 = scmp.eq.s32.totalorder %s59, 0
      %s62 = sadd.s32 %s61, 1
      %s63 = scalar_select %p60, %s61, %s62
      %p66 = pneg %p60
      %p67 = scmp.eq.s32.totalorder %s25, 1
      %p68 = por %p66, %p67
      %p69 = scmp.ne.s32.totalorder %s61, %s64
      %p70 = scmp.eq.s32.totalorder %s25, 0
      %p71 = por %p69, %p70
      %p72 = scmp.ne.s32.totalorder %s61, %s64
      %p73 = scmp.eq.s32.totalorder %s30, 1
      %p74 = por %p72, %p73
      %p75 = scmp.ne.s32.totalorder %s64, %s65
      %p76 = scmp.eq.s32.totalorder %s30, 0
      %p77 = por %p75, %p76
      %p78 = scmp.ne.s32.totalorder %s64, %s65
      %p79 = scmp.eq.s32.totalorder %s31, 1
      %p80 = por %p78, %p79
      %p82 = scmp.ne.s32.totalorder %s65, %s81
      %p83 = scmp.eq.s32.totalorder %s31, 0
      %p84 = por %p82, %p83
      %s85 = ssub.s32 %s25, %s32
      %p86 = scmp.eq.s32.totalorder %s85, 0
      %s88 = sadd.s32 %s87, 1
      %s89 = scalar_select %p86, %s87, %s88
      %p92 = pneg %p86
      %p93 = scmp.eq.s32.totalorder %s25, 1
      %p94 = por %p92, %p93
      %p95 = scmp.ne.s32.totalorder %s87, %s90
      %p96 = scmp.eq.s32.totalorder %s25, 0
      %p97 = por %p95, %p96
      %p98 = scmp.ne.s32.totalorder %s87, %s90
      %p99 = scmp.eq.s32.totalorder %s30, 1
      %p100 = por %p98, %p99
      %p101 = scmp.ne.s32.totalorder %s90, %s91
      %p102 = scmp.eq.s32.totalorder %s30, 0
      %p103 = por %p101, %p102
      %p104 = scmp.ne.s32.totalorder %s90, %s91
      %p105 = scmp.eq.s32.totalorder %s31, 1
      %p106 = por %p104, %p105
      %p108 = scmp.ne.s32.totalorder %s91, %s107
      %p109 = scmp.eq.s32.totalorder %s31, 0
      %p110 = por %p108, %p109
      %s111 = ssub.s32 %s25, %s32
      %p112 = scmp.eq.s32.totalorder %s111, 0
      %s114 = sadd.s32 %s113, 1
      %s115 = scalar_select %p112, %s113, %s114
      %p118 = pneg %p112
      %p119 = scmp.eq.s32.totalorder %s25, 1
      %p120 = por %p118, %p119
      %p121 = scmp.ne.s32.totalorder %s113, %s116
      %p122 = scmp.eq.s32.totalorder %s25, 0
      %p123 = por %p121, %p122
      %p124 = scmp.ne.s32.totalorder %s113, %s116
      %p125 = scmp.eq.s32.totalorder %s30, 1
      %p126 = por %p124, %p125
      %p127 = scmp.ne.s32.totalorder %s116, %s117
      %p128 = scmp.eq.s32.totalorder %s30, 0
      %p129 = por %p127, %p128
      %p130 = scmp.ne.s32.totalorder %s116, %s117
      %p131 = scmp.eq.s32.totalorder %s31, 1
      %p132 = por %p130, %p131
      %p134 = scmp.ne.s32.totalorder %s117, %s133
      %p135 = scmp.eq.s32.totalorder %s31, 0
      %p136 = por %p134, %p135
      %s138 = sadd.s32 %s137, 1
      %p141 = scmp.eq.s32.totalorder %s25, 1
      %p142 = scmp.ne.s32.totalorder %s137, %s139
      %p143 = scmp.eq.s32.totalorder %s25, 0
      %p144 = por %p142, %p143
      %p145 = scmp.ne.s32.totalorder %s137, %s139
      %p146 = scmp.eq.s32.totalorder %s30, 1
      %p147 = por %p145, %p146
      %p148 = scmp.ne.s32.totalorder %s139, %s140
      %p149 = scmp.eq.s32.totalorder %s30, 0
      %p150 = por %p148, %p149
      %p151 = scmp.ne.s32.totalorder %s139, %s140
      %p152 = scmp.eq.s32.totalorder %s31, 1
      %p153 = por %p151, %p152
      %p155 = scmp.ne.s32.totalorder %s140, %s154
      %p156 = scmp.eq.s32.totalorder %s31, 0
      %p157 = por %p155, %p156
      %s159 = sadd.s32 %s158, 1
      %p162 = scmp.eq.s32.totalorder %s25, 1
      %p163 = scmp.ne.s32.totalorder %s158, %s160
      %p164 = scmp.eq.s32.totalorder %s25, 0
      %p165 = por %p163, %p164
      %p166 = scmp.ne.s32.totalorder %s158, %s160
      %p167 = scmp.eq.s32.totalorder %s30, 1
      %p168 = por %p166, %p167
      %p169 = scmp.ne.s32.totalorder %s160, %s161
      %p170 = scmp.eq.s32.totalorder %s30, 0
      %p171 = por %p169, %p170
      %p172 = scmp.ne.s32.totalorder %s160, %s161
      %p173 = scmp.eq.s32.totalorder %s31, 1
      %p174 = por %p172, %p173
      %p176 = scmp.ne.s32.totalorder %s161, %s175
      %p177 = scmp.eq.s32.totalorder %s31, 0
      %p178 = por %p176, %p177
      %s179 = ssub.s32 %s25, %s32
      %p180 = scmp.eq.s32.totalorder %s179, 0
      %s182 = sadd.s32 %s181, 1
      %s183 = scalar_select %p180, %s181, %s182
      %p186 = pneg %p180
      %p187 = scmp.eq.s32.totalorder %s25, 1
      %p188 = por %p186, %p187
      %p189 = scmp.ne.s32.totalorder %s181, %s184
      %p190 = scmp.eq.s32.totalorder %s25, 0
      %p191 = por %p189, %p190
      %p192 = scmp.ne.s32.totalorder %s181, %s184
      %p193 = scmp.eq.s32.totalorder %s30, 1
      %p194 = por %p192, %p193
      %p195 = scmp.ne.s32.totalorder %s184, %s185
      %p196 = scmp.eq.s32.totalorder %s30, 0
      %p197 = por %p195, %p196
      %p198 = scmp.ne.s32.totalorder %s184, %s185
      %p199 = scmp.eq.s32.totalorder %s31, 1
      %p200 = por %p198, %p199
      %p202 = scmp.ne.s32.totalorder %s185, %s201
      %p203 = scmp.eq.s32.totalorder %s31, 0
      %p204 = por %p202, %p203
      %p205 = scmp.le.s32.totalorder 1, %s25
      %p206 = scmp.lt.s32.totalorder %s25, 3
      %p207 = pnand %p205, %p206
      %p208 = pneg %p207
      // Predicated region
      $region9: #{coattention.1} parent=5 // pred_check
        _
      $region10: #{coattention.1} parent=5 // pred_check_branch
        %210 = sbr.rel (%p207) target = $region12
      $region11: #{coattention.1} parent=5 // pred_region
        %s211 = ssub.s32 %s25, 1
        // Predicated region
        $region13: #{coattention.1} parent=11 // pred_check
          %p212 = pneg %p150
        $region14: #{coattention.1} parent=11 // pred_check_branch
          %214 = sbr.rel (%p212) target = $region16
        $region15: #{coattention.1} parent=11 // pred_region
          %s216 = ssub.s32 64, 64
          %217 = vsyncadd [#allocation10], %s216
          %s219 = sshll.u32 [#allocation11], 4
          %s220 = int_to_ptr.vmem [resolvable:$true] %s219
          %222 = dma.hbm_to_vmem [thread:$0]  %s4, 64, %s220, [#allocation10]
        $region16: #{coattention.1} parent=11 // pred_fallthru
          _
        // Predicated region
        $region17: #{coattention.1} parent=11 // pred_check
          %p223 = pneg %p171
        $region18: #{coattention.1} parent=11 // pred_check_branch
          %225 = sbr.rel (%p223) target = $region20
        $region19: #{coattention.1} parent=11 // pred_region
          _
        $region20: #{coattention.1} parent=11 // pred_fallthru
          _
      $region12: #{coattention.1} parent=5 // pred_fallthru
        _
      %p226 = scmp.lt.s32.totalorder %s25, 2
      // Predicated region
      $region21: #{coattention.1} parent=5 // pred_check
        %p227 = pneg %p226
      $region22: #{coattention.1} parent=5 // pred_check_branch
        %229 = sbr.rel (%p227) target = $region24
      $region23: #{coattention.1} parent=5 // pred_region
        // Predicated region
        $region25: #{coattention.1} parent=23 // pred_check
          %p230 = pneg %p45
        $region26: #{coattention.1} parent=23 // pred_check_branch
          %232 = sbr.rel (%p230) target = $region28
        $region27: #{coattention.1} parent=23 // pred_region
          %s233 = sand.u32 %s35, 1
          %s234 = scalar_lea.sflag [#allocation4], %s233
          %s235 = sand.u32 %s35, 1
          %s236 = smul.addr %s235, 16
          %s237 = scalar_lea.vmem [#allocation3], %s236
          %s239 = ssub.s32 256, 256
          %240 = vsyncadd %s234, %s239
          %s241 = smul.addr %s25, 2
          %s242 = smul.addr %s241, 128
          %s243 = scalar_lea.hbm %s0, %s242
          %s244 = sshll.u32 %s237, 4
          %s245 = int_to_ptr.vmem [resolvable:$true] %s244
          %250 = dma.hbm_to_vmem [thread:$0]  %s243, 256, %s245, %s234, 128, 128, 8
        $region28: #{coattention.1} parent=23 // pred_fallthru
          _
        // Predicated region
        $region29: #{coattention.1} parent=23 // pred_check
          %p251 = pneg %p71
        $region30: #{coattention.1} parent=23 // pred_check_branch
          %253 = sbr.rel (%p251) target = $region32
        $region31: #{coattention.1} parent=23 // pred_region
          %s254 = sand.u32 %s25, 1
          %s255 = scalar_lea.sflag [#allocation7], %s254
          %s256 = sand.u32 %s61, 1
          %s257 = smul.addr %s256, 8
          %s258 = scalar_lea.vmem [#allocation6], %s257
          %s260 = ssub.s32 128, 128
          %261 = vsyncadd %s255, %s260
          %s262 = smul.addr %s25, 128
          %s263 = scalar_lea.hbm %s1, %s262
          %s265 = sshll.u32 %s258, 4
          %s266 = int_to_ptr.vmem [resolvable:$true] %s265
          %268 = dma.hbm_to_vmem [thread:$0]  %s263, 128, %s266, %s255
        $region32: #{coattention.1} parent=23 // pred_fallthru
          _
        // Predicated region
        $region33: #{coattention.1} parent=23 // pred_check
          %p269 = pneg %p97
        $region34: #{coattention.1} parent=23 // pred_check_branch
          %271 = sbr.rel (%p269) target = $region36
        $region35: #{coattention.1} parent=23 // pred_region
          %s272 = sand.u32 %s25, 1
          %s273 = scalar_lea.sflag [#allocation7], %s272
          %s274 = sand.u32 %s87, 1
          %s275 = smul.addr %s274, 16
          %s276 = scalar_lea.vmem [#allocation8], %s275
          %s278 = ssub.s32 256, 256
          %279 = vsyncadd %s273, %s278
          %s280 = smul.addr %s25, 2
          %s281 = smul.addr %s280, 128
          %s282 = scalar_lea.hbm %s2, %s281
          %s283 = sshll.u32 %s276, 4
          %s284 = int_to_ptr.vmem [resolvable:$true] %s283
          %289 = dma.hbm_to_vmem [thread:$0]  %s282, 256, %s284, %s273, 128, 128, 8
        $region36: #{coattention.1} parent=23 // pred_fallthru
          _
        // Predicated region
        $region37: #{coattention.1} parent=23 // pred_check
          %p290 = pneg %p123
        $region38: #{coattention.1} parent=23 // pred_check_branch
          %292 = sbr.rel (%p290) target = $region40
        $region39: #{coattention.1} parent=23 // pred_region
          %s293 = sand.u32 %s25, 1
          %s294 = scalar_lea.sflag [#allocation10], %s293
          %s295 = sand.u32 %s113, 1
          %s296 = scalar_lea.vmem [#allocation9], %s295
          %s298 = ssub.s32 16, 16
          %299 = vsyncadd %s294, %s298
          %s300 = smul.addr %s25, 16
          %s301 = scalar_lea.hbm %s3, %s300
          %s303 = sshll.u32 %s296, 4
          %s304 = int_to_ptr.vmem [resolvable:$true] %s303
          %306 = dma.hbm_to_vmem [thread:$0]  %s301, 16, %s304, %s294
        $region40: #{coattention.1} parent=23 // pred_fallthru
          _
      $region24: #{coattention.1} parent=5 // pred_fallthru
        _
      %p307 = scmp.le.s32.totalorder 1, %s25
      %p308 = scmp.lt.s32.totalorder %s25, 3
      %p309 = pnand %p307, %p308
      %p310 = pneg %p309
      // Predicated region
      $region41: #{coattention.1} parent=5 // pred_check
        _
      $region42: #{coattention.1} parent=5 // pred_check_branch
        %312 = sbr.rel (%p309) target = $region44
      $region43: #{coattention.1} parent=5 // pred_region
        %s313 = ssub.s32 %s25, 1
        %s314 = sand.u32 %s38, 1
        %s315 = scalar_lea.sflag [#allocation4], %s314
        %s316 = sand.u32 %s38, 1
        %s317 = smul.addr %s316, 16
        %s318 = scalar_lea.vmem [#allocation3], %s317
        // Predicated region
        $region45: #{coattention.1} parent=43 // pred_check
          %p319 = pneg %p51
        $region46: #{coattention.1} parent=43 // pred_check_branch
          %321 = sbr.rel (%p319) target = $region48
        $region47: #{coattention.1} parent=43 // pred_region
          %322 = dma.done %s315, 256
        $region48: #{coattention.1} parent=43 // pred_fallthru
          _
        %s323 = sand.u32 %s30, 1
        %s324 = scalar_lea.sflag [#allocation7], %s323
        %s325 = sand.u32 %s64, 1
        %s326 = smul.addr %s325, 8
        %s327 = scalar_lea.vmem [#allocation6], %s326
        // Predicated region
        $region49: #{coattention.1} parent=43 // pred_check
          %p328 = pneg %p77
        $region50: #{coattention.1} parent=43 // pred_check_branch
          %330 = sbr.rel (%p328) target = $region52
        $region51: #{coattention.1} parent=43 // pred_region
          %331 = dma.done %s324, 128
        $region52: #{coattention.1} parent=43 // pred_fallthru
          _
        %s332 = sand.u32 %s30, 1
        %s333 = scalar_lea.sflag [#allocation7], %s332
        %s334 = sand.u32 %s90, 1
        %s335 = smul.addr %s334, 16
        %s336 = scalar_lea.vmem [#allocation8], %s335
        // Predicated region
        $region53: #{coattention.1} parent=43 // pred_check
          %p337 = pneg %p103
        $region54: #{coattention.1} parent=43 // pred_check_branch
          %339 = sbr.rel (%p337) target = $region56
        $region55: #{coattention.1} parent=43 // pred_region
          %340 = dma.done %s333, 256
        $region56: #{coattention.1} parent=43 // pred_fallthru
          _
        %s341 = sand.u32 %s30, 1
        %s342 = scalar_lea.sflag [#allocation10], %s341
        %s343 = sand.u32 %s116, 1
        %s344 = scalar_lea.vmem [#allocation9], %s343
        // Predicated region
        $region57: #{coattention.1} parent=43 // pred_check
          %p345 = pneg %p129
        $region58: #{coattention.1} parent=43 // pred_check_branch
          %347 = sbr.rel (%p345) target = $region60
        $region59: #{coattention.1} parent=43 // pred_region
          %348 = dma.done %s342, 16
        $region60: #{coattention.1} parent=43 // pred_fallthru
          _
        // Predicated region
        $region61: #{coattention.1} parent=43 // pred_check
          %p349 = pneg %p150
        $region62: #{coattention.1} parent=43 // pred_check_branch
          %351 = sbr.rel (%p349) target = $region64
        $region63: #{coattention.1} parent=43 // pred_region
          %352 = dma.done [#allocation10], 64
        $region64: #{coattention.1} parent=43 // pred_fallthru
          _
        %s353 = sand.u32 %s38, 1
        %s354 = scalar_lea.sflag [#allocation4], %s353
        %s355 = sand.u32 %s38, 1
        %s356 = smul.addr %s355, 16
        %s357 = scalar_lea.vmem [#allocation3], %s356
        %p358 = pneg %p51
        %p359 = pneg %p48
        %s360 = sand.u32 %s30, 1
        %s361 = scalar_lea.sflag [#allocation7], %s360
        %s362 = sand.u32 %s64, 1
        %s363 = smul.addr %s362, 8
        %s364 = scalar_lea.vmem [#allocation6], %s363
        %p365 = pneg %p77
        %p366 = pneg %p74
        %s367 = sand.u32 %s30, 1
        %s368 = scalar_lea.sflag [#allocation7], %s367
        %s369 = sand.u32 %s90, 1
        %s370 = smul.addr %s369, 16
        %s371 = scalar_lea.vmem [#allocation8], %s370
        %p372 = pneg %p103
        %p373 = pneg %p100
        %s374 = sand.u32 %s30, 1
        %s375 = scalar_lea.sflag [#allocation10], %s374
        %s376 = sand.u32 %s116, 1
        %s377 = scalar_lea.vmem [#allocation9], %s376
        %p378 = pneg %p129
        %p379 = pneg %p126
        %p380 = pneg %p150
        %p381 = pneg %p147
        %p382 = pneg %p171
        %p383 = pneg %p168
        %p384 = pneg %p197
        %p385 = pneg %p194
        %s386 = sand.u32 %s184, 1
        %s387 = scalar_lea.sflag [#allocation5], %s386
        %s388 = sand.u32 %s184, 1
        %s389 = smul.addr %s388, 16
        %s390 = scalar_lea.vmem [#allocation12], %s389
        %v392 = vld [vmem:[%s318] sm:$0xff]
        %v393 = vld [vmem:[%s318 + $0x8] sm:$0xff]
        %v394 = vld [vmem:[%s327] sm:$0xff]
        %v395 = vld [vmem:[%s336] sm:$0xff]
        %v396 = vld [vmem:[%s336 + $0x8] sm:$0xff]
        %v397 = vld [vmem:[%s344] sm:$0x1]
        %v398 = vld [vmem:[#allocation11] sm:$0x7]
        %s399 = sld [smem:[#allocation2]]
        %v400 = vlaneseq
        %v401 = vshrl.u32 %v400, 7
        %v402 = vsub.s32 2, %v401
        %v403 = vrot.slane %v398, %v402
        %v404 = vmul.f32 %v392, %v403
        %v405 = vmul.f32 %v393, %v403
        %v406 = vlaneseq
        %v407 = vshrl.u32 %v406, 7
        %v408 = vsub.s32 1, %v407
        %v409 = vrot.slane %v398, %v408
        %v410 = vadd.f32 %v404, %v409
        %v411 = vadd.f32 %v405, %v409
        %v412 = vpack.c.bf16 %v411, %v410
        %v413 = vpack.c.bf16 %v394, %v394
        %v414 = vlaneseq
        %v415 = vshrl.u32 %v414, 7
        %v416 = vsub.s32 0, %v415
        %v417 = vrot.slane %v398, %v416
        %v418 = vmul.f32 %v392, %v417
        %v419 = vmul.f32 %v393, %v417
        %vm420 = vcmask 261120
        %v421 = vsel %vm420, %v418, 0.0
        %422 = vadd.xlane.f32.xlu0 %v421
        %v423 = vpop.xlane.xlu0 %422
        %v424 = vsel %vm420, %v419, 0.0
        %425 = vadd.xlane.f32.xlu0 %v424
        %v426 = vpop.xlane.xlu0 %425
        %v427 = vstv %s399
        %v428 = vadd.f32 %v423, %v427
        %v429 = vadd.f32 %v426, %v427
        %v431 = vsel %vm420, %v412, 0
        %v434 = vsel %vm420, %v413, 0
        %436 = vmatprep.subr.bf16.mxu0 0
        %437 = vmatpush1.bf16.xpose.msra.mxu0 %v434
        %438 = vmatprep.subr.bf16.mxu0 0
        %439 = vmatpush1.bf16.xpose.msra.mxu0 0
        %440 = vmatprep.subr.bf16.mxu0 0
        %441 = vmatpush1.bf16.xpose.msra.mxu0 0
        %442 = vmatprep.subr.bf16.mxu0 0
        %443 = vmatpush1.bf16.xpose.msra.mxu0 0
        %444 = vmatprep.subr.bf16.mxu0 0
        %445 = vmatpush1.bf16.xpose.msra.mxu0 0
        %446 = vmatprep.subr.bf16.mxu0 0
        %447 = vmatpush1.bf16.xpose.msra.mxu0 0
        %448 = vmatprep.subr.bf16.mxu0 0
        %449 = vmatpush1.bf16.xpose.msra.mxu0 0
        %450 = vmatprep.subr.bf16.mxu0 0
        %451 = vmatpush1.bf16.xpose.msra.mxu0 0
        %452 = vmatprep.subr.bf16.mxu0 0
        %453 = vmatpush1.bf16.xpose.msra.mxu0 0
        %454 = vmatprep.subr.bf16.mxu0 0
        %455 = vmatpush1.bf16.xpose.msra.mxu0 0
        %456 = vmatprep.subr.bf16.mxu0 0
        %457 = vmatpush1.bf16.xpose.msra.mxu0 0
        %458 = vmatprep.subr.bf16.mxu0 0
        %459 = vmatpush1.bf16.xpose.msra.mxu0 0
        %460 = vmatprep.subr.bf16.mxu0 0
        %461 = vmatpush1.bf16.xpose.msra.mxu0 0
        %462 = vmatprep.subr.bf16.mxu0 0
        %463 = vmatpush1.bf16.xpose.msra.mxu0 0
        %464 = vmatprep.subr.bf16.mxu0 0
        %465 = vmatpush1.bf16.xpose.msra.mxu0 0
        %466 = vmatprep.subr.bf16.mxu0 0
        %467 = vmatpush1.bf16.xpose.msra.mxu0 0
        %468 = vmatprep.mubr.bf16.mxu0 0
        %469 = vmatmul.mubr.bf16.gmra.mrb[0].mxu0 %v431
        %v470 = vpop.f32.mrb[0].mxu0
        %v471 = vadd.f32 %v428, %v470
        %v472 = vpop.f32.mrb[0].mxu0
        %v473 = vpop.f32.mrb[0].mxu0
        %v474 = vadd.f32 %v429, %v473
        %v475 = vpop.f32.mrb[0].mxu0
        %476 = vdwg.mxu0
        %vm477 = vcmp.gt.f32.partialorder %v397, 0.0
        %v478 = vsel %vm477, 0.0, -1e+30
        %vm479 = vcmp.gt.f32.partialorder %v395, 0.0
        %vm480 = vcmp.gt.f32.partialorder %v396, 0.0
        %v481 = vsel %vm479, 0.0, -1e+30
        %v482 = vsel %vm480, 0.0, -1e+30
        %v484 = vlaneseq
        %v485 = vshrl.u32 %v484, 7
        %v486 = vsub.s32 0, %v485
        %v487 = vrot.slane %v478, %v486
        %v489 = vadd.f32 %v471, %v487
        %v490 = vadd.f32 %v474, %v487
        %492 = vset.pattern.permute.xlu0 0
        %493 = vperm.xlu0 %492, %v481
        %v494 = vpop.permute.xlu0 %493
        %497 = vset.pattern.permute.xlu0 0
        %498 = vperm.xlu0 %497, %v482
        %v499 = vpop.permute.xlu0 %498
        %v501 = vadd.f32 %v471, %v494
        %v502 = vadd.f32 %v474, %v499
        %vm503 = vcmask 64512
        %v504 = vsel %vm503, %v489, -inf
        %505 = vmax.xlane.f32.xlu0 %v504
        %v506 = vpop.xlane.xlu0 %505
        %v507 = vsel %vm503, %v490, -inf
        %508 = vmax.xlane.f32.xlu0 %v507
        %v509 = vpop.xlane.xlu0 %508
        %v510 = vsel %vm503, %v501, -inf
        %v511 = vsel %vm503, %v502, -inf
        %v512 = vmax.f32 %v510, %v511
        %v513 = vrot.slane %v512, 4
        %v514 = vmax.f32 %v512, %v513
        %v515 = vrot.slane %v514, 2
        %v516 = vmax.f32 %v514, %v515
        %v517 = vrot.slane %v516, 1
        %v518 = vmax.f32 %v516, %v517
        %v519 = vsub.f32 %v489, %v506
        %v520 = vsub.f32 %v490, %v509
        %v521 = vmul.f32 %v519, 1.442695
        %v522 = vpow.pop %v521
        %v523 = vmul.f32 %v520, 1.442695
        %v524 = vpow.pop %v523
        %v525 = vsub.f32 %v501, %v518
        %v526 = vsub.f32 %v502, %v518
        %v527 = vmul.f32 %v525, 1.442695
        %v528 = vpow.pop %v527
        %v529 = vmul.f32 %v526, 1.442695
        %v530 = vpow.pop %v529
        %v531 = vsel %vm503, %v522, 0.0
        %532 = vadd.xlane.f32.xlu0 %v531
        %v533 = vpop.xlane.xlu0 %532
        %v534 = vsel %vm503, %v524, 0.0
        %535 = vadd.xlane.f32.xlu0 %v534
        %v536 = vpop.xlane.xlu0 %535
        %v537 = vrcp.pop %v533
        %v538 = vrcp.pop %v536
        %v539 = vsel %vm503, %v528, 0.0
        %v540 = vsel %vm503, %v530, 0.0
        %v541 = vadd.f32 %v539, %v540
        %v542 = vrot.slane %v541, 4
        %v543 = vadd.f32 %v541, %v542
        %v544 = vrot.slane %v543, 2
        %v545 = vadd.f32 %v543, %v544
        %v546 = vrot.slane %v545, 1
        %v547 = vadd.f32 %v545, %v546
        %v548 = vrcp.pop %v547
        %v549 = vpack.c.bf16 %v524, %v522
        %v550 = vmul.f32 %v528, %v548
        %v551 = vmul.f32 %v530, %v548
        %v552 = vpack.c.bf16 %v551, %v550
        %v553 = vpack.c.bf16 %v393, %v392
        %v555 = vsel %vm503, %v549, 0
        %vm557 = vcmask 1043456
        %v558 = vsel %vm557, %v413, 0
        %560 = vmatprep.subr.bf16.mxu0 0
        %561 = vmatpush1.bf16.msra.mxu0 %v558
        %562 = vmatprep.subr.bf16.mxu0 0
        %563 = vmatpush1.bf16.msra.mxu0 0
        %564 = vmatprep.subr.bf16.mxu0 0
        %565 = vmatpush1.bf16.msra.mxu0 0
        %566 = vmatprep.subr.bf16.mxu0 0
        %567 = vmatpush1.bf16.msra.mxu0 0
        %568 = vmatprep.subr.bf16.mxu0 0
        %569 = vmatpush1.bf16.msra.mxu0 0
        %570 = vmatprep.subr.bf16.mxu0 0
        %571 = vmatpush1.bf16.msra.mxu0 0
        %572 = vmatprep.subr.bf16.mxu0 0
        %573 = vmatpush1.bf16.msra.mxu0 0
        %574 = vmatprep.subr.bf16.mxu0 0
        %575 = vmatpush1.bf16.msra.mxu0 0
        %576 = vmatprep.subr.bf16.mxu0 0
        %577 = vmatpush1.bf16.msra.mxu0 0
        %578 = vmatprep.subr.bf16.mxu0 0
        %579 = vmatpush1.bf16.msra.mxu0 0
        %580 = vmatprep.subr.bf16.mxu0 0
        %581 = vmatpush1.bf16.msra.mxu0 0
        %582 = vmatprep.subr.bf16.mxu0 0
        %583 = vmatpush1.bf16.msra.mxu0 0
        %584 = vmatprep.subr.bf16.mxu0 0
        %585 = vmatpush1.bf16.msra.mxu0 0
        %586 = vmatprep.subr.bf16.mxu0 0
        %587 = vmatpush1.bf16.msra.mxu0 0
        %588 = vmatprep.subr.bf16.mxu0 0
        %589 = vmatpush1.bf16.msra.mxu0 0
        %590 = vmatprep.subr.bf16.mxu0 0
        %591 = vmatpush1.bf16.msra.mxu0 0
        %592 = vmatprep.mubr.bf16.mxu0 0
        %593 = vmatmul.mubr.bf16.gmra.mrb[0].mxu0 %v555
        %v594 = vpop.f32.mrb[0].mxu0
        %v595 = vadd.f32 0.0, %v594
        %v596 = vpop.f32.mrb[0].mxu0
        %v597 = vpop.f32.mrb[0].mxu0
        %v598 = vadd.f32 0.0, %v597
        %v599 = vpop.f32.mrb[0].mxu0
        %600 = vdwg.mxu0
        %v601 = vmul.f32 %v595, %v537
        %v602 = vmul.f32 %v598, %v538
        %603 = vxpose.xlu0.c.b16.start [1/8] %v552, 128
        %604 = vxpose.xlu0.c.b16.cont [2/8] 0, 128
        %605 = vxpose.xlu0.c.b16.cont [3/8] 0, 128
        %606 = vxpose.xlu0.c.b16.cont [4/8] 0, 128
        %607 = vxpose.xlu0.c.b16.cont [5/8] 0, 128
        %608 = vxpose.xlu0.c.b16.cont [6/8] 0, 128
        %609 = vxpose.xlu0.c.b16.cont [7/8] 0, 128
        %610 = vxpose.xlu0.c.b16.end [8/8] 0, 128
        %v611 = vpop.trf.xlu0
        %v612 = vpop.trf.xlu0
        %v613 = vpop.trf.xlu0
        %v614 = vpop.trf.xlu0
        %v615 = vpop.trf.xlu0
        %v616 = vpop.trf.xlu0
        %v617 = vpop.trf.xlu0
        %v618 = vpop.trf.xlu0
        %vm619 = vcmask 130048
        %v621 = vsel %vm619, %v611, 0
        %623 = vmatprep.subr.bf16.mxu0 0
        %624 = vmatpush1.bf16.msra.mxu0 %v553
        %625 = vmatprep.subr.bf16.mxu0 0
        %626 = vmatpush1.bf16.msra.mxu0 0
        %627 = vmatprep.subr.bf16.mxu0 0
        %628 = vmatpush1.bf16.msra.mxu0 0
        %629 = vmatprep.subr.bf16.mxu0 0
        %630 = vmatpush1.bf16.msra.mxu0 0
        %631 = vmatprep.subr.bf16.mxu0 0
        %632 = vmatpush1.bf16.msra.mxu0 0
        %633 = vmatprep.subr.bf16.mxu0 0
        %634 = vmatpush1.bf16.msra.mxu0 0
        %635 = vmatprep.subr.bf16.mxu0 0
        %636 = vmatpush1.bf16.msra.mxu0 0
        %637 = vmatprep.subr.bf16.mxu0 0
        %638 = vmatpush1.bf16.msra.mxu0 0
        %639 = vmatprep.subr.bf16.mxu0 0
        %640 = vmatpush1.bf16.msra.mxu0 0
        %641 = vmatprep.subr.bf16.mxu0 0
        %642 = vmatpush1.bf16.msra.mxu0 0
        %643 = vmatprep.subr.bf16.mxu0 0
        %644 = vmatpush1.bf16.msra.mxu0 0
        %645 = vmatprep.subr.bf16.mxu0 0
        %646 = vmatpush1.bf16.msra.mxu0 0
        %647 = vmatprep.subr.bf16.mxu0 0
        %648 = vmatpush1.bf16.msra.mxu0 0
        %649 = vmatprep.subr.bf16.mxu0 0
        %650 = vmatpush1.bf16.msra.mxu0 0
        %651 = vmatprep.subr.bf16.mxu0 0
        %652 = vmatpush1.bf16.msra.mxu0 0
        %653 = vmatprep.subr.bf16.mxu0 0
        %654 = vmatpush1.bf16.msra.mxu0 0
        %655 = vmatprep.mubr.bf16.mxu0 0
        %656 = vmatmul.mubr.bf16.gmra.mrb[0].mxu0 %v621
        %v657 = vpop.f32.mrb[0].mxu0
        %v658 = vadd.f32 0.0, %v657
        %v659 = vpop.f32.mrb[0].mxu0
        %v660 = vpop.f32.mrb[0].mxu0
        %v661 = vpop.f32.mrb[0].mxu0
        %662 = vdwg.mxu0
        %v663 = vpack.c.bf16 %v658, %v658
        %v665 = vsel %vm557, %v663, 0
        %667 = vmatprep.subr.bf16.mxu0 0
        %668 = vmatpush1.bf16.msra.mxu0 %v665
        %669 = vmatprep.subr.bf16.mxu0 0
        %670 = vmatpush1.bf16.msra.mxu0 0
        %671 = vmatprep.subr.bf16.mxu0 0
        %672 = vmatpush1.bf16.msra.mxu0 0
        %673 = vmatprep.subr.bf16.mxu0 0
        %674 = vmatpush1.bf16.msra.mxu0 0
        %675 = vmatprep.subr.bf16.mxu0 0
        %676 = vmatpush1.bf16.msra.mxu0 0
        %677 = vmatprep.subr.bf16.mxu0 0
        %678 = vmatpush1.bf16.msra.mxu0 0
        %679 = vmatprep.subr.bf16.mxu0 0
        %680 = vmatpush1.bf16.msra.mxu0 0
        %681 = vmatprep.subr.bf16.mxu0 0
        %682 = vmatpush1.bf16.msra.mxu0 0
        %683 = vmatprep.subr.bf16.mxu0 0
        %684 = vmatpush1.bf16.msra.mxu0 0
        %685 = vmatprep.subr.bf16.mxu0 0
        %686 = vmatpush1.bf16.msra.mxu0 0
        %687 = vmatprep.subr.bf16.mxu0 0
        %688 = vmatpush1.bf16.msra.mxu0 0
        %689 = vmatprep.subr.bf16.mxu0 0
        %690 = vmatpush1.bf16.msra.mxu0 0
        %691 = vmatprep.subr.bf16.mxu0 0
        %692 = vmatpush1.bf16.msra.mxu0 0
        %693 = vmatprep.subr.bf16.mxu0 0
        %694 = vmatpush1.bf16.msra.mxu0 0
        %695 = vmatprep.subr.bf16.mxu0 0
        %696 = vmatpush1.bf16.msra.mxu0 0
        %697 = vmatprep.subr.bf16.mxu0 0
        %698 = vmatpush1.bf16.msra.mxu0 0
        %699 = vmatprep.mubr.bf16.mxu0 0
        %700 = vmatmul.mubr.bf16.gmra.mrb[0].mxu0 %v555
        %v701 = vpop.f32.mrb[0].mxu0
        %v702 = vadd.f32 0.0, %v701
        %v703 = vpop.f32.mrb[0].mxu0
        %v704 = vpop.f32.mrb[0].mxu0
        %v705 = vadd.f32 0.0, %v704
        %v706 = vpop.f32.mrb[0].mxu0
        %707 = vdwg.mxu0
        %v708 = vmul.f32 %v702, %v537
        %v709 = vmul.f32 %v705, %v538
        %v710 = vmul.f32 %v392, %v601
        %v711 = vmul.f32 %v393, %v602
        %v712 = vmul.f32 %v392, %v708
        %v713 = vmul.f32 %v393, %v709
        %716 = vrot.lane.b32.xlu0 %v601, 32
        %v717 = vpop.permute.xlu0 %716
        %718 = vrot.lane.b32.xlu0 %v602, 32
        %v719 = vpop.permute.xlu0 %718
        %724 = vrot.lane.b32.xlu0 %v710, 64
        %v725 = vpop.permute.xlu0 %724
        %726 = vrot.lane.b32.xlu0 %v711, 64
        %v727 = vpop.permute.xlu0 %726
        %732 = vrot.lane.b32.xlu0 %v712, 96
        %v733 = vpop.permute.xlu0 %732
        %734 = vrot.lane.b32.xlu0 %v713, 96
        %v735 = vpop.permute.xlu0 %734
        %v738 = vsel %vm420, %v392, %v717
        %v739 = vsel %vm420, %v393, %v719
        %vm740 = vcmask 523264
        %v741 = vsel %vm740, %v738, %v725
        %v742 = vsel %vm740, %v739, %v727
        %vm743 = vcmask 785408
        %v744 = vsel %vm743, %v741, %v733
        %v745 = vsel %vm743, %v742, %v735
        %746 = vst [vmem:[%s390] sm:$0xff] %v744
        %747 = vst [vmem:[%s390 + $0x8] sm:$0xff] %v745
        %s748 = sand.u32 %s184, 1
        %s749 = scalar_lea.sflag [#allocation5], %s748
        %s750 = sand.u32 %s184, 1
        %s751 = smul.addr %s750, 16
        %s752 = scalar_lea.vmem [#allocation12], %s751
        // Predicated region
        $region65: #{coattention.1} parent=43 // pred_check
          %p753 = pneg %p194
        $region66: #{coattention.1} parent=43 // pred_check_branch
          %755 = sbr.rel (%p753) target = $region68
        $region67: #{coattention.1} parent=43 // pred_region
          %s757 = ssub.s32 256, 256
          %758 = vsyncadd %s749, %s757
          %s759 = smul.addr %s30, 2
          %s760 = smul.addr %s759, 128
          %s761 = scalar_lea.hbm %s6, %s760
          %s762 = sshll.u32 %s752, 4
          %s763 = int_to_ptr.vmem [resolvable:$true] %s762
          %768 = dma.vmem_to_hbm [thread:$0]  %s763, 256, %s761, %s749, 128, 128, 8
        $region68: #{coattention.1} parent=43 // pred_fallthru
          _
      $region44: #{coattention.1} parent=5 // pred_fallthru
        _
      %p769 = scmp.le.s32.totalorder 2, %s25
      // Predicated region
      $region69: #{coattention.1} parent=5 // pred_check
        %p770 = pneg %p769
      $region70: #{coattention.1} parent=5 // pred_check_branch
        %772 = sbr.rel (%p770) target = $region72
      $region71: #{coattention.1} parent=5 // pred_region
        %s773 = ssub.s32 %s25, 2
        // Predicated region
        $region73: #{coattention.1} parent=71 // pred_check
          %p774 = pneg %p200
        $region74: #{coattention.1} parent=71 // pred_check_branch
          %776 = sbr.rel (%p774) target = $region76
        $region75: #{coattention.1} parent=71 // pred_region
          %s777 = sand.u32 %s185, 1
          %s778 = scalar_lea.sflag [#allocation5], %s777
          %s779 = sand.u32 %s185, 1
          %s780 = smul.addr %s779, 16
          %s781 = scalar_lea.vmem [#allocation12], %s780
          %782 = dma.done %s778, 256
        $region76: #{coattention.1} parent=71 // pred_fallthru
          _
      $region72: #{coattention.1} parent=5 // pred_fallthru
        _
    $region6: #{coattention.1} parent=1 // loop_footer
      %s29 = sadd.s32 1, %s25
    $region7: #{coattention.1} parent=1 // loop_footer_branch
      %24 = sbr.rel target = $region3
    $region8: #{coattention.1} parent=1 // loop_exit
      _
    %783 = vsyncpa [#allocation4], 1
    %s784 = scalar_lea.sflag [#allocation4], 1
    %785 = vsyncpa %s784, 1
    %786 = vsyncpa [#allocation7], 1
    %s787 = scalar_lea.sflag [#allocation7], 1
    %788 = vsyncpa %s787, 1
    %789 = vsyncpa [#allocation10], 1
    %s790 = scalar_lea.sflag [#allocation10], 1
    %791 = vsyncpa %s790, 1
    %792 = vsyncpa [#allocation5], 1
    %s793 = scalar_lea.sflag [#allocation5], 1
    %794 = vsyncpa %s793, 1

</llo_original>
